<compile_context>
chip_gen: v6e
topology: v6e:2x2x1
jax: 0.10.0
libtpu: 0.0.40
codegen_flags: <defaults>
</compile_context>

<pallas_src>
import jax
import jax.numpy as jnp
from jax.experimental import pallas as pl
from jax.experimental.pallas import tpu as pltpu

LANE = 128
BLOCK_BYTE_BUDGET = 4 * 1024 * 1024          # ~4 MiB per grid step, any dtype
VMEM_LIMIT_BYTES = 32 * 1024 * 1024          # covers 16 MiB resident on v5e too
# (1, n) blocks waste ~8x VMEM (sublane padding); keep the single-block ragged
# path to <= 512 KiB logical so in+out stay ~8 MiB physical.
RAGGED_SINGLE_BLOCK_BYTES = 512 * 1024


def _relu_kernel(x_ref, o_ref):
    # One VPU vmax per vreg against a dtype-matched scalar zero.
    o_ref[...] = jnp.maximum(x_ref[...], jnp.zeros((), x_ref.dtype))


def _custom_relu(x: jax.Array, *, block_byte_budget: int = BLOCK_BYTE_BUDGET) -> jax.Array:
    """y = relu(x), same semantics as CustomReLU.forward (minus the IPC glue)."""
    orig_shape = x.shape
    orig_dtype = x.dtype
    n = x.size
    itemsize = jnp.dtype(orig_dtype).itemsize
    # Minimum sublane tile depends on dtype packing (f32: 8, bf16: 16, int8: 32).
    sublane = max(8, 32 // itemsize)

    if n % LANE != 0:
        # Ragged element count: no metadata-only reshape to a lane-dense slab.
        if n * itemsize <= RAGGED_SINGLE_BLOCK_BYTES:
            # Single full-extent (1, n) block: Pallas masks the partial lane
            # tile in-kernel — no pad copy, no output-slice copy.
            out = pl.pallas_call(
                _relu_kernel,
                out_shape=jax.ShapeDtypeStruct((1, n), orig_dtype),
                input_output_aliases={0: 0},
            )(x.reshape(1, n))
            return out.reshape(orig_shape)
        # TODO(synk): huge non-128-multiple tensors never occur for VGG
        # activations; a padded round-trip would cost ~3x HBM traffic, so let
        # XLA's fused elementwise maximum handle this corner at the roofline.
        return jnp.maximum(x, jnp.zeros((), orig_dtype))

    # Hot path: metadata-only reshape to a lane-dense [rows, 128] slab.
    rows = n // LANE
    slab = x.reshape(rows, LANE)

    # ~4 MiB blocks regardless of dtype (amortizes the ~0.35 us per-step
    # pipeline overhead equally for f32 / bf16 / int8).
    target_rows = max(sublane, (block_byte_budget // (LANE * itemsize)) // sublane * sublane)

    if rows <= sublane:
        # Tiny input: full-extent sublane block (allowed even if not a multiple of 8).
        row_tile = rows
    else:
        # Cap so the grid has >= 2 roughly balanced steps: with
        # dimension_semantics=("parallel",) this keeps both v7x TensorCores
        # busy on mid-size VGG layers; on single-TC v5e/v6e the extra step is
        # one ~0.35 us overhead, i.e. noise.
        half_rows = sublane * pl.cdiv(rows, 2 * sublane)
        row_tile = min(target_rows, half_rows)

    # The grid does NOT need to divide the array: the last block may be partial.
    grid = (pl.cdiv(rows, row_tile),)

    out = pl.pallas_call(
        _relu_kernel,
        out_shape=jax.ShapeDtypeStruct((rows, LANE), orig_dtype),
        grid_spec=pltpu.PrefetchScalarGridSpec(
            num_scalar_prefetch=0,
            grid=grid,
            in_specs=[pl.BlockSpec((row_tile, LANE), lambda i: (i, 0))],
            out_specs=pl.BlockSpec((row_tile, LANE), lambda i: (i, 0)),
        ),
        compiler_params=pltpu.CompilerParams(
            dimension_semantics=("parallel",),
            vmem_limit_bytes=VMEM_LIMIT_BYTES,
        ),
        # Output may be written in place of the input slab (needs caller-side
        # donation to take effect — see the jitted wrapper below).
        input_output_aliases={0: 0},
    )(slab)

    return out.reshape(orig_shape)


# Jitted entry point.  donate_argnums=(0,) lets XLA honor the in-place alias
# hint and removes per-op host dispatch; callers must not reuse x afterwards
# (it is dead after ReLU in the IPC-replacement use case).
custom_relu = jax.jit(_custom_relu, donate_argnums=(0,))


if __name__ == "__main__":
    key = jax.random.PRNGKey(0)

    # Small NCHW input consistent with a VGG-style activation map.
    x = jax.random.normal(key, (2, 4, 16, 16), dtype=jnp.float32)
    y_ref = jnp.maximum(x, 0.0)

    # bf16 copy (exercises the dtype-matched zero / dtype-scaled tiling).
    x_bf16 = x.astype(jnp.bfloat16)
    y_bf16_ref = jnp.maximum(x_bf16, jnp.zeros((), jnp.bfloat16))

    # Ragged element count (exercises the masked single-block path).
    x2 = jax.random.normal(jax.random.PRNGKey(0), (3, 5, 7, 9), dtype=jnp.float32)
    y2_ref = jnp.maximum(x2, 0.0)

    y = jax.block_until_ready(custom_relu(x))          # x is donated here
    assert y.shape == (2, 4, 16, 16) and y.dtype == jnp.float32
    assert bool(jnp.allclose(y, y_ref)), "mismatch vs reference relu (f32)"

    y_bf16 = jax.block_until_ready(custom_relu(x_bf16))
    assert y_bf16.shape == (2, 4, 16, 16) and y_bf16.dtype == jnp.bfloat16
    assert bool(jnp.array_equal(y_bf16, y_bf16_ref)), "mismatch vs reference relu (bf16)"

    y2 = jax.block_until_ready(custom_relu(x2))
    assert y2.shape == (3, 5, 7, 9) and y2.dtype == jnp.float32
    assert bool(jnp.allclose(y2, y2_ref)), "mismatch on ragged path"

    print("KERNEL_OK")
</pallas_src>

<mosaic_0001>
module attributes {stable_mosaic.version = 11 : i64} {
  func.func @_relu_kernel(%arg0: i32, %arg1: memref<8x128xf32, #tpu.memory_space<vmem>>, %arg2: memref<8x128xf32, #tpu.memory_space<vmem>>) attributes {dimension_semantics = [#tpu.dimension_semantics<parallel>], iteration_bounds = array<i64: 2>, scalar_prefetch = 0 : i64, scratch_operands = 0 : i64, tpu.core_type = #tpu.core_type<tc>, window_params = [{transform_indices = @transform_0, window_bounds = array<i64: 8, 128>}, {transform_indices = @transform_1, window_bounds = array<i64: 8, 128>}]} {
    %c0 = arith.constant 0 : index
    %c0_0 = arith.constant 0 : index
    %0 = vector.load %arg1[%c0, %c0_0] : memref<8x128xf32, #tpu.memory_space<vmem>>, vector<8x128xf32>
    %cst = arith.constant 0.000000e+00 : f32
    %1 = vector.broadcast %cst : f32 to vector<8x128xf32>
    %2 = arith.maximumf %0, %1 : vector<8x128xf32>
    %c0_1 = arith.constant 0 : index
    %c0_2 = arith.constant 0 : index
    %3 = vector.load %arg2[%c0_1, %c0_2] : memref<8x128xf32, #tpu.memory_space<vmem>>, vector<8x128xf32>
    tpu.vector_store %arg2[%c0_1, %c0_2], %2 {strides = array<i32>} : memref<8x128xf32, #tpu.memory_space<vmem>>, vector<8x128xf32>,
    return
  }
  func.func @transform_0(%arg0: i32) -> (i32, i32) {
    %c0_i32 = arith.constant 0 : i32
    %c0_i32_0 = arith.constant 0 : i32
    return %arg0, %c0_i32 : i32, i32
  }
  func.func @transform_1(%arg0: i32) -> (i32, i32) {
    %c0_i32 = arith.constant 0 : i32
    %c0_i32_0 = arith.constant 0 : i32
    return %arg0, %c0_i32 : i32, i32
  }
}

</mosaic_0001>

<llo_original>
// kernel: _custom_relu.1
$region0: #{_custom_relu.1}
  #allocation0 [shape = 'u32[]', space=smem, size = 0x4, offset = 0x4, fixed_abs, tag = 'smem constant byte address 0x4 - core index']
  #allocation1 [shape = 'u32[144,128]{1,0:T(1,128)}', space=vmem, size = 0x12000, scoped, tag = 'internal scratch']
  %s0 = inlined_call_operand.vmem [shape: f32[16,128], index: 0, kind: input, shape index: {}, may-alias: {0,1}]
  %s1 = inlined_call_operand.vmem [shape: f32[16,128], index: 1, kind: output, shape index: {}, may-alias: {0,1}]
  %s2 = sld [smem:[#allocation0]]
  $region37: #{_custom_relu.1} parent=0
    _
  %s4 = ssub.s32 1, %s2
  %s5 = scalar_select 0, %s4, %s2
  loop: start=0, step=1, limit=4
  $region2: #{_custom_relu.1} parent=0 // loop_pre_header
    _
  $region3: #{_custom_relu.1} parent=0 // loop_header
    %s7 = sphi 0, %s11
    %p8 = scmp.ge.s32.totalorder %s7, 4
    %s17 = sphi 0, %s19
    %s20 = sphi 0, %s17
    %s21 = sphi 0, %s20
    %s37 = sphi 0, %s21
    %s43 = sphi 0, %s45
    %s46 = sphi 0, %s43
    %s47 = sphi 0, %s46
    %s63 = sphi 0, %s47
  $region4: #{_custom_relu.1} parent=0 // loop_header_branch
    %10 = sbr.rel (%p8) target = $region8
  $region5: #{_custom_relu.1} parent=0 // loop_body
    %s12 = ssub.s32 %s7, 1
    %s13 = ssub.s32 %s7, 2
    %s14 = sadd.s32 %s7, 1
    %s15 = ssub.s32 %s7, %s14
    %p16 = scmp.eq.s32.totalorder %s15, 0
    %s18 = sadd.s32 %s17, 1
    %s19 = scalar_select %p16, %s17, %s18
    %p22 = pneg %p16
    %p23 = scmp.eq.s32.totalorder %s7, 1
    %p24 = por %p22, %p23
    %p25 = scmp.ne.s32.totalorder %s17, %s20
    %p26 = scmp.eq.s32.totalorder %s7, 0
    %p27 = por %p25, %p26
    %p28 = scmp.ne.s32.totalorder %s17, %s20
    %p29 = scmp.eq.s32.totalorder %s12, 1
    %p30 = por %p28, %p29
    %p31 = scmp.ne.s32.totalorder %s20, %s21
    %p32 = scmp.eq.s32.totalorder %s12, 0
    %p33 = por %p31, %p32
    %p34 = scmp.ne.s32.totalorder %s20, %s21
    %p35 = scmp.eq.s32.totalorder %s13, 1
    %p36 = por %p34, %p35
    %p38 = scmp.ne.s32.totalorder %s21, %s37
    %p39 = scmp.eq.s32.totalorder %s13, 0
    %p40 = por %p38, %p39
    %s41 = ssub.s32 %s7, %s14
    %p42 = scmp.eq.s32.totalorder %s41, 0
    %s44 = sadd.s32 %s43, 1
    %s45 = scalar_select %p42, %s43, %s44
    %p48 = pneg %p42
    %p49 = scmp.eq.s32.totalorder %s7, 1
    %p50 = por %p48, %p49
    %p51 = scmp.ne.s32.totalorder %s43, %s46
    %p52 = scmp.eq.s32.totalorder %s7, 0
    %p53 = por %p51, %p52
    %p54 = scmp.ne.s32.totalorder %s43, %s46
    %p55 = scmp.eq.s32.totalorder %s12, 1
    %p56 = por %p54, %p55
    %p57 = scmp.ne.s32.totalorder %s46, %s47
    %p58 = scmp.eq.s32.totalorder %s12, 0
    %p59 = por %p57, %p58
    %p60 = scmp.ne.s32.totalorder %s46, %s47
    %p61 = scmp.eq.s32.totalorder %s13, 1
    %p62 = por %p60, %p61
    %p64 = scmp.ne.s32.totalorder %s47, %s63
    %p65 = scmp.eq.s32.totalorder %s13, 0
    %p66 = por %p64, %p65
    %p67 = scmp.le.s32.totalorder 1, %s7
    %p68 = scmp.lt.s32.totalorder %s7, 3
    %p69 = pnand %p67, %p68
    %p70 = pneg %p69
    // Predicated region
    $region9: #{_custom_relu.1} parent=5 // pred_check
      _
    $region10: #{_custom_relu.1} parent=5 // pred_check_branch
      %72 = sbr.rel (%p69) target = $region12
    $region11: #{_custom_relu.1} parent=5 // pred_region
      %s73 = ssub.s32 %s7, 1
    $region12: #{_custom_relu.1} parent=5 // pred_fallthru
      _
    %p74 = scmp.lt.s32.totalorder %s7, 2
    // Predicated region
    $region13: #{_custom_relu.1} parent=5 // pred_check
      %p75 = pneg %p74
    $region14: #{_custom_relu.1} parent=5 // pred_check_branch
      %77 = sbr.rel (%p75) target = $region16
    $region15: #{_custom_relu.1} parent=5 // pred_region
      // Predicated region
      $region17: #{_custom_relu.1} parent=15 // pred_check
        %p78 = pneg %p27
      $region18: #{_custom_relu.1} parent=15 // pred_check_branch
        %80 = sbr.rel (%p78) target = $region20
      $region19: #{_custom_relu.1} parent=15 // pred_region
        %p81 = scmp.lt.s32.totalorder %s7, 1
        %s82 = scalar_select %p81, %s7, 1
        %s83 = smul.addr %s82, 8
        %s84 = scalar_lea.vmem %s0, %s83
      $region20: #{_custom_relu.1} parent=15 // pred_fallthru
        _
    $region16: #{_custom_relu.1} parent=5 // pred_fallthru
      _
    %p85 = scmp.le.s32.totalorder 1, %s7
    %p86 = scmp.lt.s32.totalorder %s7, 3
    %p87 = pnand %p85, %p86
    %p88 = pneg %p87
    // Predicated region
    $region21: #{_custom_relu.1} parent=5 // pred_check
      _
    $region22: #{_custom_relu.1} parent=5 // pred_check_branch
      %90 = sbr.rel (%p87) target = $region24
    $region23: #{_custom_relu.1} parent=5 // pred_region
      %s91 = ssub.s32 %s7, 1
      %p92 = scmp.lt.s32.totalorder %s12, 1
      %s93 = scalar_select %p92, %s12, 1
      %s94 = smul.addr %s93, 8
      %s95 = scalar_lea.vmem %s0, %s94
      %p96 = pneg %p33
      %p97 = pneg %p30
      %p98 = pneg %p59
      %p99 = pneg %p56
      %p100 = scmp.lt.s32.totalorder %s12, 1
      %s101 = scalar_select %p100, %s12, 1
      %s102 = smul.addr %s101, 8
      %s103 = scalar_lea.vmem %s1, %s102
      %p104 = scmp.lt.s32.totalorder %s12, 1
      %s105 = scalar_select %p104, %s12, 1
      %s106 = smul.addr %s105, 8
      %s107 = scalar_lea.vmem %s0, %s106
      %p108 = scmp.lt.s32.totalorder %s12, 1
      %s109 = scalar_select %p108, %s12, 1
      %s110 = smul.addr %s109, 8
      %s111 = scalar_lea.vmem %s1, %s110
      %v112 = vld [vmem:[%s107] sm:$0xff]
      %v113 = vmax.f32 %v112, 0.0
      %114 = vst [vmem:[%s111] sm:$0xff] %v113
      %p115 = scmp.lt.s32.totalorder %s12, 1
      %s116 = scalar_select %p115, %s12, 1
      %s117 = smul.addr %s116, 8
      %s118 = scalar_lea.vmem %s1, %s117
      // Predicated region
      $region25: #{_custom_relu.1} parent=23 // pred_check
        %p119 = pneg %p56
      $region26: #{_custom_relu.1} parent=23 // pred_check_branch
        %121 = sbr.rel (%p119) target = $region28
      $region27: #{_custom_relu.1} parent=23 // pred_region
        _
      $region28: #{_custom_relu.1} parent=23 // pred_fallthru
        _
    $region24: #{_custom_relu.1} parent=5 // pred_fallthru
      _
    %p122 = scmp.le.s32.totalorder 2, %s7
    // Predicated region
    $region29: #{_custom_relu.1} parent=5 // pred_check
      %p123 = pneg %p122
    $region30: #{_custom_relu.1} parent=5 // pred_check_branch
      %125 = sbr.rel (%p123) target = $region32
    $region31: #{_custom_relu.1} parent=5 // pred_region
      %s126 = ssub.s32 %s7, 2
      // Predicated region
      $region33: #{_custom_relu.1} parent=31 // pred_check
        %p127 = pneg %p62
      $region34: #{_custom_relu.1} parent=31 // pred_check_branch
        %129 = sbr.rel (%p127) target = $region36
      $region35: #{_custom_relu.1} parent=31 // pred_region
        %p130 = scmp.lt.s32.totalorder %s13, 1
        %s131 = scalar_select %p130, %s13, 1
        %s132 = smul.addr %s131, 8
        %s133 = scalar_lea.vmem %s1, %s132
      $region36: #{_custom_relu.1} parent=31 // pred_fallthru
        _
    $region32: #{_custom_relu.1} parent=5 // pred_fallthru
      _
  $region6: #{_custom_relu.1} parent=0 // loop_footer
    %s11 = sadd.s32 1, %s7
  $region7: #{_custom_relu.1} parent=0 // loop_footer_branch
    %6 = sbr.rel target = $region3
  $region8: #{_custom_relu.1} parent=0 // loop_exit
    _

</llo_original>
